<compile_context>
chip_gen: v7x
topology: tpu7x:2x2x1
jax: 0.10.0
libtpu: 0.0.40
codegen_flags: <defaults>
</compile_context>

<pallas_src>
import jax
import jax.numpy as jnp
from jax.experimental import pallas as pl
from jax.experimental.pallas import tpu as pltpu


def _cdiv(a, b):
    return -(-a // b)


def _round_up(a, m):
    return _cdiv(a, m) * m


def _scale_bias_tanh_kernel(wb_ref, x_ref, o_ref):
    # wb_ref: SMEM (2,) f32 scalars [w, b];  x_ref/o_ref: (TM, LANES) VMEM tiles.
    x = x_ref[...]
    w = wb_ref[0]
    b = wb_ref[1]
    if x.dtype == jnp.float32:
        y = x * w + b
    else:
        # bf16 path (v6e/v7x have bf16 VPU/EUP): stay narrow, halve bytes/vregs.
        y = x * w.astype(x.dtype) + b.astype(x.dtype)
    o_ref[...] = jnp.tanh(y).astype(o_ref.dtype)


def _pallas_elementwise(x2d, wb, tm, grid, buffered):
    rows, lanes = x2d.shape
    n_elems = rows * lanes
    idx = lambda i: (i, 0)

    in_spec = pl.BlockSpec((tm, lanes), idx)
    if buffered:
        try:
            # 3-deep input pipeline hides DMA turnaround bubbles between steps.
            in_spec = pl.BlockSpec((tm, lanes), idx, pipeline_mode=pl.Buffered(3))
        except Exception:
            pass  # older JAX without pipeline_mode; default double-buffering

    return pl.pallas_call(
        _scale_bias_tanh_kernel,
        out_shape=jax.ShapeDtypeStruct((rows, lanes), x2d.dtype),
        grid=(grid,),
        in_specs=[
            pl.BlockSpec(memory_space=pltpu.MemorySpace.SMEM),  # [w, b] scalars
            in_spec,                                            # streaming input
        ],
        out_specs=pl.BlockSpec((tm, lanes), idx),
        compiler_params=pltpu.CompilerParams(
            dimension_semantics=("parallel",),       # v7x: shard rows over 2 TCs
            vmem_limit_bytes=32 * 1024 * 1024,       # safe on v5e..v7x
        ),
        cost_estimate=pl.CostEstimate(
            flops=2 * n_elems,
            transcendentals=n_elems,
            bytes_accessed=2 * n_elems * x2d.dtype.itemsize,
        ),
    )(wb, x2d)


def _run_2d(flat, lanes, w_s, b_s, tm):
    """flat.size must be divisible by `lanes`; returns a flat result (no pads)."""
    rows = flat.size // lanes
    x2d = flat.reshape(rows, lanes)              # contiguous reshape: free
    rows_cap = _round_up(rows, 8)

    if tm is None:
        bytes_per_row = lanes * 4                # heuristics in f32 terms
        # ~1 MiB tile floor (85% of HBM roofline measured) ... ~4 MiB ceiling.
        min_tm = max(8, _round_up((1 << 20) // bytes_per_row, 8))
        max_tm = max(min_tm, ((4 << 20) // bytes_per_row) // 8 * 8)
        # ...but cap so large arrays get >= ~8 grid steps (pipelining + dual-TC).
        tm_steps = max(8, _round_up(_cdiv(rows, 8), 8))
        tm = min(max_tm, max(min_tm, tm_steps))
    tm = max(8, min(_round_up(int(tm), 8), rows_cap))
    grid = _cdiv(rows, tm)                       # ragged last block: Pallas masks

    wb = jnp.stack([w_s, b_s])                   # (2,) f32 -> SMEM
    try:
        out2d = _pallas_elementwise(x2d, wb, tm, grid, buffered=True)
    except Exception:
        out2d = _pallas_elementwise(x2d, wb, tm, grid, buffered=False)
    return out2d.reshape(flat.shape)


def conv_transpose1x1_tanh(x_nchw, weight, bias, *, min_pallas_elems=4096,
                           tm=None, lanes=None):
    """Forward of ConvTranspose2d(1, 1, 1, stride=1) + tanh.

    x_nchw: (N, 1, H, W); weight: (1, 1, 1, 1) [PyTorch (C_in, C_out, kH, kW)];
    bias: (1,).
    """
    N, C_in, H, W = x_nchw.shape
    C_out = weight.shape[1]
    assert C_in == 1 and C_out == 1, "kernel specialized to the 1->1 channel case"
    if lanes is not None:
        assert int(lanes) % 128 == 0

    w_s = weight.reshape(()).astype(jnp.float32)
    b_s = bias.reshape(()).astype(jnp.float32)
    M = N * C_in * H * W

    def xla_path(x):
        return jnp.tanh(x.astype(jnp.float32) * w_s + b_s).astype(x_nchw.dtype)

    # Tiny inputs (the module's literal 2x1x1x1): pallas_call is pure dispatch
    # overhead; let XLA fuse it.
    if M < min_pallas_elems:
        return xla_path(x_nchw)

    # Pick the widest lane count that divides M so the (rows, LANES) view needs
    # no padding and no output slice.
    if lanes is None:
        lanes_found = None
        for cand in (1024, 512, 256, 128):
            if M % cand == 0:
                lanes_found = cand
                break
    else:
        lanes_found = int(lanes) if M % int(lanes) == 0 else None

    flat = x_nchw.reshape(-1)                    # NCHW with C=1: already dense

    if lanes_found is not None:
        out_flat = _run_2d(flat, lanes_found, w_s, b_s, tm)
        return out_flat.reshape(N, C_out, H, W)

    # M not a multiple of 128: divisible prefix through Pallas, short tail
    # (< LANES elements) via a tiny XLA epilogue.
    lanes_rag = int(lanes) if lanes is not None else 512
    prefix = (M // lanes_rag) * lanes_rag
    if prefix == 0:
        return xla_path(x_nchw)
    head = _run_2d(flat[:prefix], lanes_rag, w_s, b_s, tm)
    tail = xla_path(flat[prefix:])
    return jnp.concatenate([head, tail]).reshape(N, C_out, H, W)


if __name__ == "__main__":
    key = jax.random.PRNGKey(0)
    kx, kw, kb, kx2, kx3, kx4 = jax.random.split(key, 6)

    # ConvTranspose2d(1, 1, 1) parameters (PyTorch layout): weight (1,1,1,1), bias (1,)
    weight = jax.random.uniform(kw, (1, 1, 1, 1), minval=-1.0, maxval=1.0,
                                dtype=jnp.float32)
    bias = jax.random.uniform(kb, (1,), minval=-1.0, maxval=1.0, dtype=jnp.float32)
    w0 = weight[0, 0, 0, 0]
    b0 = bias[0]

    # (a) The module's literal input shape (2,1,1,1): tiny -> XLA fast path.
    x_tiny = jax.random.normal(kx, (2, 1, 1, 1), dtype=jnp.float32)
    out_tiny = jax.block_until_ready(conv_transpose1x1_tanh(x_tiny, weight, bias))
    ref_tiny = jnp.tanh(x_tiny * w0 + b0)
    assert out_tiny.shape == (2, 1, 1, 1)
    assert jnp.allclose(out_tiny, ref_tiny, atol=1e-5, rtol=1e-5)

    # (b) Larger spatial size, divisible path (no pad / no slice), default tiling.
    x_big = jax.random.normal(kx2, (2, 1, 64, 64), dtype=jnp.float32)
    out_big = jax.block_until_ready(
        conv_transpose1x1_tanh(x_big, weight, bias, min_pallas_elems=0))
    ref_big = jnp.tanh(x_big * w0 + b0)
    assert out_big.shape == x_big.shape
    assert jnp.allclose(out_big, ref_big, atol=1e-5, rtol=1e-5)

    # (c) Multi-step grid with a ragged last row-block (correctness check only;
    #     tm=8 tiles are deliberately tiny and not for perf numbers).
    x_rag_rows = jax.random.normal(kx3, (2, 1, 60, 64), dtype=jnp.float32)
    out_rr = jax.block_until_ready(
        conv_transpose1x1_tanh(x_rag_rows, weight, bias, min_pallas_elems=0, tm=8))
    ref_rr = jnp.tanh(x_rag_rows * w0 + b0)
    assert jnp.allclose(out_rr, ref_rr, atol=1e-5, rtol=1e-5)

    # (d) Element count not a multiple of 128: Pallas prefix + XLA tail epilogue.
    x_rag = jax.random.normal(kx4, (2, 1, 63, 65), dtype=jnp.float32)
    out_rag = jax.block_until_ready(
        conv_transpose1x1_tanh(x_rag, weight, bias, min_pallas_elems=0))
    ref_rag = jnp.tanh(x_rag * w0 + b0)
    assert jnp.allclose(out_rag, ref_rag, atol=1e-5, rtol=1e-5)

    print("KERNEL_OK")
</pallas_src>

<mosaic_0001>
module attributes {stable_mosaic.version = 11 : i64} {
  func.func @_scale_bias_tanh_kernel(%arg0: i32, %arg1: memref<2xf32, #tpu.memory_space<smem>>, %arg2: memref<8x1024xf32, #tpu.memory_space<vmem>>, %arg3: memref<8x1024xf32, #tpu.memory_space<vmem>>) attributes {dimension_semantics = [#tpu.dimension_semantics<parallel>], iteration_bounds = array<i64: 1>, scalar_prefetch = 0 : i64, scratch_operands = 0 : i64, tpu.core_type = #tpu.core_type<tc>, window_params = [{transform_indices = @transform_0, window_bounds = array<i64: 2>}, {transform_indices = @transform_1, window_bounds = array<i64: 8, 1024>}, {transform_indices = @transform_2, window_bounds = array<i64: 8, 1024>}]} {
    %c0 = arith.constant 0 : index
    %c0_0 = arith.constant 0 : index
    %0 = vector.load %arg2[%c0, %c0_0] : memref<8x1024xf32, #tpu.memory_space<vmem>>, vector<8x1024xf32>
    %c0_1 = arith.constant 0 : index
    %1 = memref.load %arg1[%c0_1] : memref<2xf32, #tpu.memory_space<smem>>
    %c1 = arith.constant 1 : index
    %2 = memref.load %arg1[%c1] : memref<2xf32, #tpu.memory_space<smem>>
    %3 = vector.broadcast %1 : f32 to vector<8x1024xf32>
    %4 = arith.mulf %0, %3 : vector<8x1024xf32>
    %5 = vector.broadcast %2 : f32 to vector<8x1024xf32>
    %6 = arith.addf %4, %5 : vector<8x1024xf32>
    %7 = math.tanh %6 : vector<8x1024xf32>
    %c0_2 = arith.constant 0 : index
    %c0_3 = arith.constant 0 : index
    %8 = vector.load %arg3[%c0_2, %c0_3] : memref<8x1024xf32, #tpu.memory_space<vmem>>, vector<8x1024xf32>
    tpu.vector_store %arg3[%c0_2, %c0_3], %7 {strides = array<i32>} : memref<8x1024xf32, #tpu.memory_space<vmem>>, vector<8x1024xf32>,
    return
  }
  func.func @transform_0(%arg0: i32) -> i32 {
    %c0_i32 = arith.constant 0 : i32
    %c0_i32_0 = arith.constant 0 : i32
    return %c0_i32 : i32
  }
  func.func @transform_1(%arg0: i32) -> (i32, i32) {
    %c0_i32 = arith.constant 0 : i32
    %c0_i32_0 = arith.constant 0 : i32
    return %arg0, %c0_i32 : i32, i32
  }
  func.func @transform_2(%arg0: i32) -> (i32, i32) {
    %c0_i32 = arith.constant 0 : i32
    %c0_i32_0 = arith.constant 0 : i32
    return %arg0, %c0_i32 : i32, i32
  }
}

</mosaic_0001>

<llo_original>
// kernel: tpu_custom_call.1
$region0: #{tpu_custom_call.1}
  #allocation0 [shape = 'u32[]', space=smem, size = 0x4, offset = 0x4, fixed_abs, tag = 'smem constant byte address 0x4 - core index']
  #allocation1 [shape = 'u32[144,128]{1,0:T(1,128)}', space=vmem, size = 0x12000, scoped, tag = 'internal scratch']
  %s0 = inlined_call_operand.hbm [shape: f32[2], index: 0, kind: input, shape index: {}]
  %s1 = inlined_call_operand.hbm [shape: f32[8,1024], index: 1, kind: input, shape index: {}]
  %s2 = inlined_call_operand.hbm [shape: f32[8,1024], index: 2, kind: output, shape index: {}]
  %s3 = sld [smem:[#allocation0]]
  $region26: #{tpu_custom_call.1} parent=0
    _
  %s5 = ssub.s32 1, %s3
  %s6 = scalar_select 0, %s5, %s3
  $region1: #{tpu_custom_call.1} parent=0
    #allocation2 [shape = 'u8[512]{0}', space=smem, size = 0x200, scoped, tag = 'input window, operand 0, single buffered']
    #allocation3 [shape = 's32[1]{0}', space=sflag, size = 0x4, scoped, tag = 'scoped memory for tpu_custom_call.1']
    #allocation4 [shape = 's32[1]{0}', space=sflag, size = 0x4, scoped, tag = 'scoped memory for tpu_custom_call.1']
    #allocation5 [shape = 's32[1]{0}', space=sflag, size = 0x4, scoped, tag = 'scoped memory for tpu_custom_call.1']
    #allocation6 [shape = 'u8[32768]{0}', space=vmem, size = 0x8000, scoped, tag = 'input window, operand 1, single buffered']
    #allocation7 [shape = 'u8[32768]{0}', space=vmem, size = 0x8000, scoped, tag = 'output window, operand 0, single buffered']
    %7 = vsyncpa [#allocation5], 0
    %8 = vsyncpa [#allocation3], 0
    %9 = vsyncpa [#allocation4], 0
    // Predicated region
    $region2: #{tpu_custom_call.1} parent=1 // pred_check
      _
    $region3: #{tpu_custom_call.1} parent=1 // pred_check_branch
      %11 = sbr.rel (0) target = $region5
    $region4: #{tpu_custom_call.1} parent=1 // pred_region
      %s13 = ssub.s32 16, 16
      %14 = vsyncadd [#allocation5], %s13
      %17 = dma.hbm_to_smem %s0, 16, [#allocation2], [#allocation5]
    $region5: #{tpu_custom_call.1} parent=1 // pred_fallthru
      _
    // Predicated region
    $region6: #{tpu_custom_call.1} parent=1 // pred_check
      _
    $region7: #{tpu_custom_call.1} parent=1 // pred_check_branch
      %19 = sbr.rel (0) target = $region9
    $region8: #{tpu_custom_call.1} parent=1 // pred_region
      %s21 = ssub.s32 1024, 1024
      %22 = vsyncadd [#allocation3], %s21
      %s24 = sshll.u32 [#allocation6], 4
      %s25 = int_to_ptr.vmem [resolvable:$true] %s24
      %27 = dma.hbm_to_vmem [thread:$0]  %s1, 1024, %s25, [#allocation3]
    $region9: #{tpu_custom_call.1} parent=1 // pred_fallthru
      _
    // Predicated region
    $region10: #{tpu_custom_call.1} parent=1 // pred_check
      _
    $region11: #{tpu_custom_call.1} parent=1 // pred_check_branch
      %29 = sbr.rel (0) target = $region13
    $region12: #{tpu_custom_call.1} parent=1 // pred_region
      %30 = dma.done [#allocation5], 16
    $region13: #{tpu_custom_call.1} parent=1 // pred_fallthru
      _
    // Predicated region
    $region14: #{tpu_custom_call.1} parent=1 // pred_check
      _
    $region15: #{tpu_custom_call.1} parent=1 // pred_check_branch
      %32 = sbr.rel (0) target = $region17
    $region16: #{tpu_custom_call.1} parent=1 // pred_region
      %33 = dma.done [#allocation3], 1024
    $region17: #{tpu_custom_call.1} parent=1 // pred_fallthru
      _
    %34 = sfence
    %v35 = vld [vmem:[#allocation6] sm:$0xff]
    %v36 = vld [vmem:[#allocation6 + $0x8] sm:$0xff]
    %v37 = vld [vmem:[#allocation6 + $0x10] sm:$0xff]
    %v38 = vld [vmem:[#allocation6 + $0x18] sm:$0xff]
    %v39 = vld [vmem:[#allocation6 + $0x20] sm:$0xff]
    %v40 = vld [vmem:[#allocation6 + $0x28] sm:$0xff]
    %v41 = vld [vmem:[#allocation6 + $0x30] sm:$0xff]
    %v42 = vld [vmem:[#allocation6 + $0x38] sm:$0xff]
    %s43 = sld [smem:[#allocation2]]
    %s44 = sld [smem:[#allocation2 + $0x1]]
    %v45 = vstv %s43
    %v46 = vmul.f32 %v35, %v45
    %v47 = vmul.f32 %v36, %v45
    %v48 = vmul.f32 %v37, %v45
    %v49 = vmul.f32 %v38, %v45
    %v50 = vmul.f32 %v39, %v45
    %v51 = vmul.f32 %v40, %v45
    %v52 = vmul.f32 %v41, %v45
    %v53 = vmul.f32 %v42, %v45
    %v54 = vstv %s44
    %v55 = vadd.f32 %v46, %v54
    %v56 = vadd.f32 %v47, %v54
    %v57 = vadd.f32 %v48, %v54
    %v58 = vadd.f32 %v49, %v54
    %v59 = vadd.f32 %v50, %v54
    %v60 = vadd.f32 %v51, %v54
    %v61 = vadd.f32 %v52, %v54
    %v62 = vadd.f32 %v53, %v54
    %v63 = vtanh.pop %v55
    %v64 = vtanh.pop %v56
    %v65 = vtanh.pop %v57
    %v66 = vtanh.pop %v58
    %v67 = vtanh.pop %v59
    %v68 = vtanh.pop %v60
    %v69 = vtanh.pop %v61
    %v70 = vtanh.pop %v62
    %71 = vst [vmem:[#allocation7] sm:$0xff] %v63
    %72 = vst [vmem:[#allocation7 + $0x8] sm:$0xff] %v64
    %73 = vst [vmem:[#allocation7 + $0x10] sm:$0xff] %v65
    %74 = vst [vmem:[#allocation7 + $0x18] sm:$0xff] %v66
    %75 = vst [vmem:[#allocation7 + $0x20] sm:$0xff] %v67
    %76 = vst [vmem:[#allocation7 + $0x28] sm:$0xff] %v68
    %77 = vst [vmem:[#allocation7 + $0x30] sm:$0xff] %v69
    %78 = vst [vmem:[#allocation7 + $0x38] sm:$0xff] %v70
    // Predicated region
    $region18: #{tpu_custom_call.1} parent=1 // pred_check
      _
    $region19: #{tpu_custom_call.1} parent=1 // pred_check_branch
      %80 = sbr.rel (0) target = $region21
    $region20: #{tpu_custom_call.1} parent=1 // pred_region
      %s82 = ssub.s32 1024, 1024
      %83 = vsyncadd [#allocation4], %s82
      %s85 = sshll.u32 [#allocation7], 4
      %s86 = int_to_ptr.vmem [resolvable:$true] %s85
      %88 = dma.vmem_to_hbm [thread:$0]  %s86, 1024, %s2, [#allocation4]
    $region21: #{tpu_custom_call.1} parent=1 // pred_fallthru
      _
    // Predicated region
    $region22: #{tpu_custom_call.1} parent=1 // pred_check
      _
    $region23: #{tpu_custom_call.1} parent=1 // pred_check_branch
      %90 = sbr.rel (0) target = $region25
    $region24: #{tpu_custom_call.1} parent=1 // pred_region
      %91 = dma.done [#allocation4], 1024
    $region25: #{tpu_custom_call.1} parent=1 // pred_fallthru
      _
    %92 = vsyncpa [#allocation3], 1
    %93 = vsyncpa [#allocation4], 1
    %94 = vsyncpa [#allocation5], 1

</llo_original>
